<compile_context>
chip_gen: v7x
topology: tpu7x:2x2x1
jax: 0.10.0
libtpu: 0.0.40
codegen_flags: <defaults>
</compile_context>

<pallas_src>
import jax
import jax.numpy as jnp
from jax.experimental import pallas as pl
from jax.experimental.pallas import tpu as pltpu


# ---------------------------------------------------------------------------
# Kernels
# ---------------------------------------------------------------------------

def _global_softmax_kernel(x_ref, o_ref):
    """Single-block path: whole (padded) slab resident in VMEM."""
    x = x_ref[...].astype(jnp.float32)        # f32 everywhere (safe on v5e)
    e = jnp.exp(x)                            # padded -inf entries -> exactly 0
    denom = jnp.sum(e)                        # global reduction (XLU)
    o_ref[...] = (e * (1.0 / denom)).astype(o_ref.dtype)   # exact reciprocal


def _exp_partial_sum_kernel(x_ref, sum_ref):
    """Tiled pass 1: accumulate sum(exp(tile)) into a (1,1) f32 accumulator."""
    @pl.when(pl.program_id(0) == 0)
    def _():
        sum_ref[...] = jnp.zeros_like(sum_ref)
    e = jnp.exp(x_ref[...].astype(jnp.float32))
    sum_ref[...] = sum_ref[...] + jnp.sum(e)


def _exp_scale_kernel(inv_ref, x_ref, o_ref):
    """Tiled pass 2: recompute exp(tile), scale by the global reciprocal."""
    e = jnp.exp(x_ref[...].astype(jnp.float32))
    o_ref[...] = (e * inv_ref[0]).astype(o_ref.dtype)


# ---------------------------------------------------------------------------
# Wrapper
# ---------------------------------------------------------------------------

_SINGLE_BLOCK_MAX_ELEMS = 1 << 20   # ~4 MiB f32 payload -> fits every generation
_TILE_ROWS = 512                    # tiled path: (512, 512) f32 tile = 1 MiB
_TILE_LANES = 512
_VMEM_LIMIT = 32 << 20              # safe on v5e/v6e/v7x


def _pad_flat(flat: jax.Array, lanes: int, row_multiple: int):
    """Pad flat array with -inf to a multiple of row_multiple*lanes and reshape."""
    total = flat.shape[0]
    chunk = row_multiple * lanes
    padded = ((total + chunk - 1) // chunk) * chunk
    if padded != total:
        pad = jnp.full((padded - total,), -jnp.inf, dtype=flat.dtype)
        flat = jnp.concatenate([flat, pad])
    return flat.reshape(padded // lanes, lanes), padded


def _single_block_softmax(slab: jax.Array, out_dtype) -> jax.Array:
    rows, lanes = slab.shape
    n = rows * lanes
    in_bytes = n * jnp.dtype(slab.dtype).itemsize
    out_bytes = n * jnp.dtype(out_dtype).itemsize
    return pl.pallas_call(
        _global_softmax_kernel,
        out_shape=jax.ShapeDtypeStruct((rows, lanes), out_dtype),
        in_specs=[pl.BlockSpec((rows, lanes), lambda: (0, 0),
                               memory_space=pltpu.VMEM)],
        out_specs=pl.BlockSpec((rows, lanes), lambda: (0, 0),
                               memory_space=pltpu.VMEM),
        compiler_params=pltpu.CompilerParams(vmem_limit_bytes=_VMEM_LIMIT),
        cost_estimate=pl.CostEstimate(flops=2 * n, transcendentals=n,
                                      bytes_accessed=in_bytes + out_bytes),
    )(slab)


def _two_pass_softmax(slab: jax.Array, out_dtype) -> jax.Array:
    rows, lanes = slab.shape
    n = rows * lanes
    num_tiles = rows // _TILE_ROWS
    in_bytes = n * jnp.dtype(slab.dtype).itemsize
    out_bytes = n * jnp.dtype(out_dtype).itemsize

    # Pass 1: global sum(exp(x)) via a resident (1,1) accumulator.
    denom = pl.pallas_call(
        _exp_partial_sum_kernel,
        out_shape=jax.ShapeDtypeStruct((1, 1), jnp.float32),
        grid=(num_tiles,),
        in_specs=[pl.BlockSpec((_TILE_ROWS, lanes), lambda i: (i, 0))],
        out_specs=pl.BlockSpec((1, 1), lambda i: (0, 0)),
        compiler_params=pltpu.CompilerParams(
            dimension_semantics=("arbitrary",),
            vmem_limit_bytes=_VMEM_LIMIT),
        cost_estimate=pl.CostEstimate(flops=n, transcendentals=n,
                                      bytes_accessed=in_bytes + 4),
    )(slab)

    inv = (1.0 / denom.reshape(())).reshape(1).astype(jnp.float32)

    # Pass 2: recompute exp and scale (embarrassingly parallel row tiles).
    out = pl.pallas_call(
        _exp_scale_kernel,
        out_shape=jax.ShapeDtypeStruct((rows, lanes), out_dtype),
        grid=(num_tiles,),
        in_specs=[pl.BlockSpec(memory_space=pltpu.SMEM),           # inv (scalar)
                  pl.BlockSpec((_TILE_ROWS, lanes), lambda i: (i, 0))],
        out_specs=pl.BlockSpec((_TILE_ROWS, lanes), lambda i: (i, 0)),
        compiler_params=pltpu.CompilerParams(
            dimension_semantics=("parallel",),
            vmem_limit_bytes=_VMEM_LIMIT),
        cost_estimate=pl.CostEstimate(flops=n, transcendentals=n,
                                      bytes_accessed=in_bytes + out_bytes + 4),
    )(inv, slab)
    return out


def global_softmax(x: jax.Array) -> jax.Array:
    """exp(x) / sum(exp(x)) over all elements; same shape/dtype as x."""
    orig_shape = x.shape
    orig_dtype = x.dtype
    total = x.size
    flat = x.reshape(total)

    if total <= _SINGLE_BLOCK_MAX_ELEMS:
        # Lane width: widest of 256..2048 that does not over-pad the input.
        lanes = 128
        for cand in (2048, 1024, 512, 256):
            if 8 * cand <= total:
                lanes = cand
                break
        slab, padded = _pad_flat(flat, lanes, row_multiple=8)
        out = _single_block_softmax(slab, orig_dtype)
    else:
        slab, padded = _pad_flat(flat, _TILE_LANES, row_multiple=_TILE_ROWS)
        out = _two_pass_softmax(slab, orig_dtype)

    return out.reshape(padded)[:total].reshape(orig_shape)


# ---------------------------------------------------------------------------
# Self-test
# ---------------------------------------------------------------------------

if __name__ == "__main__":
    key = jax.random.PRNGKey(0)

    # Small NCHW input matching the module's typical usage (single-block path).
    x = jax.random.normal(key, (2, 4, 16, 16), dtype=jnp.float32)
    y = global_softmax(x)
    jax.block_until_ready(y)

    ref = jnp.exp(x) / jnp.sum(jnp.exp(x))
    assert y.shape == x.shape
    assert y.dtype == x.dtype
    assert jnp.allclose(y, ref, atol=1e-6, rtol=1e-6)
    assert jnp.allclose(jnp.sum(y), 1.0, atol=1e-5)

    # Larger input to exercise the tiled two-pass path.
    x2 = jax.random.normal(jax.random.PRNGKey(1), (8, 8, 128, 256),
                           dtype=jnp.float32)
    y2 = global_softmax(x2)
    jax.block_until_ready(y2)
    ref2 = jnp.exp(x2) / jnp.sum(jnp.exp(x2))
    assert y2.shape == x2.shape
    assert jnp.allclose(y2, ref2, rtol=1e-4, atol=1e-12)

    print("KERNEL_OK")
</pallas_src>

<mosaic_0001>
module attributes {stable_mosaic.version = 11 : i64} {
  func.func @_global_softmax_kernel(%arg0: memref<8x256xf32, #tpu.memory_space<vmem>>, %arg1: memref<8x256xf32, #tpu.memory_space<vmem>>) attributes {dimension_semantics = [], scalar_prefetch = 0 : i64, scratch_operands = 0 : i64, tpu.core_type = #tpu.core_type<tc>} {
    %c0 = arith.constant 0 : index
    %c0_0 = arith.constant 0 : index
    %0 = vector.load %arg0[%c0, %c0_0] : memref<8x256xf32, #tpu.memory_space<vmem>>, vector<8x256xf32>
    %1 = math.exp %0 : vector<8x256xf32>
    %2 = vector.shape_cast %1 : vector<8x256xf32> to vector<1x8x256xf32>
    %cst = arith.constant dense<0.000000e+00> : vector<1xf32>
    %3 = vector.multi_reduction <add>, %2, %cst [1, 2] : vector<1x8x256xf32> to vector<1xf32>
    %4 = vector.shape_cast %3 : vector<1xf32> to vector<1x1x1xf32>
    %5 = vector.extract %4[0, 0, 0] : f32 from vector<1x1x1xf32>
    %cst_1 = arith.constant 1.000000e+00 : f32
    %6 = arith.divf %cst_1, %5 : f32
    %7 = vector.broadcast %6 : f32 to vector<8x256xf32>
    %8 = arith.mulf %1, %7 : vector<8x256xf32>
    %c0_2 = arith.constant 0 : index
    %c0_3 = arith.constant 0 : index
    %9 = vector.load %arg1[%c0_2, %c0_3] : memref<8x256xf32, #tpu.memory_space<vmem>>, vector<8x256xf32>
    tpu.vector_store %arg1[%c0_2, %c0_3], %8 {strides = array<i32>} : memref<8x256xf32, #tpu.memory_space<vmem>>, vector<8x256xf32>,
    return
  }
}

</mosaic_0001>

<llo_original>
// kernel: tpu_custom_call.1
$region0: #{tpu_custom_call.1}
  #allocation0 [shape = 'u32[]', space=smem, size = 0x4, offset = 0x4, fixed_abs, tag = 'smem constant byte address 0x4 - core index']
  #allocation1 [shape = 'u32[144,128]{1,0:T(1,128)}', space=vmem, size = 0x12000, scoped, tag = 'internal scratch']
  %s0 = inlined_call_operand.hbm [shape: f32[8,256], index: 0, kind: input, shape index: {}]
  %s1 = inlined_call_operand.hbm [shape: f32[8,256], index: 1, kind: output, shape index: {}]
  %s2 = sld [smem:[#allocation0]]
  $region18: #{tpu_custom_call.1} parent=0
    _
  %s4 = ssub.s32 1, %s2
  %s5 = scalar_select 0, %s4, %s2
  $region1: #{tpu_custom_call.1} parent=0
    #allocation2 [shape = 'u8[8192]{0}', space=vmem, size = 0x2000, scoped, tag = 'input window, operand 0, single buffered']
    #allocation3 [shape = 's32[1]{0}', space=sflag, size = 0x4, scoped, tag = 'scoped memory for tpu_custom_call.1']
    #allocation4 [shape = 's32[1]{0}', space=sflag, size = 0x4, scoped, tag = 'scoped memory for tpu_custom_call.1']
    #allocation5 [shape = 'u8[8192]{0}', space=vmem, size = 0x2000, scoped, tag = 'output window, operand 0, single buffered']
    %6 = vsyncpa [#allocation3], 0
    %7 = vsyncpa [#allocation4], 0
    // Predicated region
    $region2: #{tpu_custom_call.1} parent=1 // pred_check
      _
    $region3: #{tpu_custom_call.1} parent=1 // pred_check_branch
      %9 = sbr.rel (0) target = $region5
    $region4: #{tpu_custom_call.1} parent=1 // pred_region
      %s11 = ssub.s32 256, 256
      %12 = vsyncadd [#allocation3], %s11
      %s14 = sshll.u32 [#allocation2], 4
      %s15 = int_to_ptr.vmem [resolvable:$true] %s14
      %17 = dma.hbm_to_vmem [thread:$0]  %s0, 256, %s15, [#allocation3]
    $region5: #{tpu_custom_call.1} parent=1 // pred_fallthru
      _
    // Predicated region
    $region6: #{tpu_custom_call.1} parent=1 // pred_check
      _
    $region7: #{tpu_custom_call.1} parent=1 // pred_check_branch
      %19 = sbr.rel (0) target = $region9
    $region8: #{tpu_custom_call.1} parent=1 // pred_region
      %20 = dma.done [#allocation3], 256
    $region9: #{tpu_custom_call.1} parent=1 // pred_fallthru
      _
    %v21 = vld [vmem:[#allocation2] sm:$0xff]
    %v22 = vld [vmem:[#allocation2 + $0x8] sm:$0xff]
    %v23 = vmul.f32 %v21, 1.442695
    %v24 = vpow.pop %v23
    %v25 = vmul.f32 %v22, 1.442695
    %v26 = vpow.pop %v25
    %v27 = vadd.f32 %v24, %v26
    %28 = vadd.xlane.f32.xlu0 %v27
    %v29 = vpop.xlane.xlu0 %28
    %v30 = vrot.slane %v29, 4
    %v31 = vadd.f32 %v29, %v30
    %v32 = vrot.slane %v31, 2
    %v33 = vadd.f32 %v31, %v32
    %v34 = vrot.slane %v33, 1
    %v35 = vadd.f32 %v33, %v34
    %s36 = vtos %v35
    %v37 = vstv %s36
    %v38 = vrcp.pop %v37
    %s39 = vtos %v38
    %v40 = vstv %s39
    %v41 = vmul.f32 %v24, %v40
    %v42 = vmul.f32 %v26, %v40
    %43 = vst [vmem:[#allocation5] sm:$0xff] %v41
    %44 = vst [vmem:[#allocation5 + $0x8] sm:$0xff] %v42
    // Predicated region
    $region10: #{tpu_custom_call.1} parent=1 // pred_check
      _
    $region11: #{tpu_custom_call.1} parent=1 // pred_check_branch
      %46 = sbr.rel (0) target = $region13
    $region12: #{tpu_custom_call.1} parent=1 // pred_region
      %s48 = ssub.s32 256, 256
      %49 = vsyncadd [#allocation4], %s48
      %s51 = sshll.u32 [#allocation5], 4
      %s52 = int_to_ptr.vmem [resolvable:$true] %s51
      %54 = dma.vmem_to_hbm [thread:$0]  %s52, 256, %s1, [#allocation4]
    $region13: #{tpu_custom_call.1} parent=1 // pred_fallthru
      _
    // Predicated region
    $region14: #{tpu_custom_call.1} parent=1 // pred_check
      _
    $region15: #{tpu_custom_call.1} parent=1 // pred_check_branch
      %56 = sbr.rel (0) target = $region17
    $region16: #{tpu_custom_call.1} parent=1 // pred_region
      %57 = dma.done [#allocation4], 256
    $region17: #{tpu_custom_call.1} parent=1 // pred_fallthru
      _
    %58 = vsyncpa [#allocation3], 1
    %59 = vsyncpa [#allocation4], 1

</llo_original>
